<compile_context>
chip_gen: v7x
topology: tpu7x:2x2x1
jax: 0.10.0
libtpu: 0.0.40
codegen_flags: <defaults>
</compile_context>

<pallas_src>
import functools

import jax
import jax.numpy as jnp
from jax import lax
from jax.experimental import pallas as pl
from jax.experimental.pallas import tpu as pltpu


# ---------------------------------------------------------------------------
# Pallas kernels
# ---------------------------------------------------------------------------
def _inorm_kernel(x_ref, o_ref, *, eps, relu):
    # x_ref / o_ref : (tile_rows, HW) pipelined blocks.
    x = x_ref[...].astype(jnp.float32)
    inv_hw = 1.0 / float(x.shape[-1])

    # One-pass statistics: E[x], E[x^2] (f32 accumulation, biased variance).
    s1 = jnp.sum(x, axis=-1, keepdims=True)
    s2 = jnp.sum(x * x, axis=-1, keepdims=True)
    mean = s1 * inv_hw
    var = jnp.maximum(s2 * inv_hw - mean * mean, 0.0)
    scale = lax.rsqrt(var + eps)          # EUP slot, effectively free
    shift = -mean * scale

    y = x * scale + shift                 # 2 VALU ops / element
    if relu:
        y = jnp.maximum(y, 0.0)
    o_ref[...] = y.astype(o_ref.dtype)


def _inorm_residual_kernel(x_ref, r_ref, o_ref, *, eps):
    # Instance-norm of x fused with the ResBlock residual add.
    x = x_ref[...].astype(jnp.float32)
    inv_hw = 1.0 / float(x.shape[-1])

    s1 = jnp.sum(x, axis=-1, keepdims=True)
    s2 = jnp.sum(x * x, axis=-1, keepdims=True)
    mean = s1 * inv_hw
    var = jnp.maximum(s2 * inv_hw - mean * mean, 0.0)
    scale = lax.rsqrt(var + eps)
    shift = -mean * scale

    y = x * scale + shift + r_ref[...].astype(jnp.float32)
    o_ref[...] = y.astype(o_ref.dtype)


# ---------------------------------------------------------------------------
# Tiling helpers
# ---------------------------------------------------------------------------
def _vmem_budget_bytes():
    """(buffer_budget, vmem_limit), conservative across v5e/v6e/v7x."""
    cap = 64 * 1024 * 1024  # smallest per-core VMEM (v7x) if the query fails
    try:
        cap = int(pltpu.get_tpu_info().vmem_capacity_bytes)
    except Exception:
        pass
    return int(cap * 0.55), int(cap * 0.75)


def _pick_tile_rows(bc, hw, itemsize, buffer_budget, n_streams):
    """Largest sublane-pack-aligned row tile that fits the VMEM budget."""
    itemsize = int(itemsize)
    pack = max(8, 32 // max(itemsize, 1))  # 8 for f32, 16 for bf16, 32 for int8
    if bc <= pack:
        return bc  # single block spanning the whole (tiny) row axis
    # n_streams blocks, double-buffered, native dtype, plus f32 compute temps.
    bytes_per_row = 2 * n_streams * hw * itemsize + 3 * hw * 4
    max_rows = max(pack, buffer_budget // max(bytes_per_row, 1))
    max_rows = (max_rows // pack) * pack
    bc_pad = -(-bc // pack) * pack
    tile_rows = max(pack, min(bc_pad, max_rows))
    tile_rows = (tile_rows // pack) * pack
    # Keep >= 2 grid steps when possible so the "parallel" axis can shard
    # across v7x's two TensorCores instead of serializing onto one.
    if tile_rows >= bc_pad and bc_pad >= 2 * pack:
        tile_rows = max(pack, (-(-(bc_pad // 2) // pack)) * pack)
    return tile_rows


def _norm_call(kernel, inputs, bc, hw, dtype, tile_rows, vmem_limit, n_streams):
    grid_n = pl.cdiv(bc, tile_rows)
    itemsize = int(jnp.dtype(dtype).itemsize)
    cost = pl.CostEstimate(
        flops=8 * bc * hw,
        transcendentals=bc,
        bytes_accessed=n_streams * bc * hw * itemsize,
    )
    spec = pl.BlockSpec((tile_rows, hw), lambda i: (i, 0))
    return pl.pallas_call(
        kernel,
        out_shape=jax.ShapeDtypeStruct((bc, hw), dtype),
        grid_spec=pltpu.PrefetchScalarGridSpec(
            num_scalar_prefetch=0,
            grid=(grid_n,),
            in_specs=[spec] * len(inputs),
            out_specs=spec,
        ),
        compiler_params=pltpu.CompilerParams(
            dimension_semantics=("parallel",),
            vmem_limit_bytes=vmem_limit,
        ),
        cost_estimate=cost,
    )(*inputs)


def instance_norm_relu_2d(x, *, eps=1e-5, relu=True):
    """x: (B, C, H, W) -> InstanceNorm(x) (optionally followed by ReLU)."""
    B, C, H, W = x.shape
    BC, HW = B * C, H * W
    buffer_budget, vmem_limit = _vmem_budget_bytes()
    tile_rows = _pick_tile_rows(BC, HW, jnp.dtype(x.dtype).itemsize,
                                buffer_budget, n_streams=2)
    out2 = _norm_call(
        functools.partial(_inorm_kernel, eps=eps, relu=relu),
        [x.reshape(BC, HW)], BC, HW, x.dtype, tile_rows, vmem_limit, n_streams=2)
    return out2.reshape(B, C, H, W)


def instance_norm_residual_2d(x, residual, *, eps=1e-5):
    """InstanceNorm(x) + residual, fused. Both (B, C, H, W)."""
    B, C, H, W = x.shape
    BC, HW = B * C, H * W
    buffer_budget, vmem_limit = _vmem_budget_bytes()
    tile_rows = _pick_tile_rows(BC, HW, jnp.dtype(x.dtype).itemsize,
                                buffer_budget, n_streams=3)
    out2 = _norm_call(
        functools.partial(_inorm_residual_kernel, eps=eps),
        [x.reshape(BC, HW), residual.reshape(BC, HW)],
        BC, HW, x.dtype, tile_rows, vmem_limit, n_streams=3)
    return out2.reshape(B, C, H, W)


# ---------------------------------------------------------------------------
# ResBlocks forward
# ---------------------------------------------------------------------------
def conv2d_3x3(x, w, b):
    # TODO(synk): 3x3 convolution stays in XLA (lax.conv); only norm /
    # activation / residual fusion runs as Pallas kernels.
    y = lax.conv_general_dilated(
        x, w, window_strides=(1, 1), padding=((1, 1), (1, 1)),
        dimension_numbers=("NCHW", "OIHW", "NCHW"))
    return y + b.reshape(1, -1, 1, 1)


def res_blocks_forward(x, params, *, eps=1e-5):
    """ResBlocks(norm='in', activation='relu', pad_type='zero') forward."""
    for p in params:
        residual = x
        h = conv2d_3x3(x, p["w1"], p["b1"])
        h = instance_norm_relu_2d(h, eps=eps, relu=True)
        h = conv2d_3x3(h, p["w2"], p["b2"])
        x = instance_norm_residual_2d(h, residual, eps=eps)
    return x


# ---------------------------------------------------------------------------
# Pure-JAX reference
# ---------------------------------------------------------------------------
def _inorm_ref(x, eps):
    B, C, H, W = x.shape
    xf = x.reshape(B * C, H * W).astype(jnp.float32)
    mean = jnp.mean(xf, axis=-1, keepdims=True)
    var = jnp.mean(jnp.square(xf - mean), axis=-1, keepdims=True)
    out = (xf - mean) / jnp.sqrt(var + eps)
    return out.reshape(B, C, H, W).astype(x.dtype)


def _reference(x, params, eps=1e-5):
    for p in params:
        residual = x
        h = conv2d_3x3(x, p["w1"], p["b1"])
        h = jnp.maximum(_inorm_ref(h, eps), 0.0)
        h = conv2d_3x3(h, p["w2"], p["b2"])
        x = _inorm_ref(h, eps) + residual
    return x


if __name__ == "__main__":
    # ResBlocks(num_blocks=2, dim=4) on x of shape (2, 4, 16, 16).
    num_blocks, dim, batch, H, W = 2, 4, 2, 16, 16
    eps = 1e-5

    key = jax.random.PRNGKey(0)
    keys = jax.random.split(key, 1 + 4 * num_blocks)
    x = jax.random.normal(keys[0], (batch, dim, H, W), dtype=jnp.float32)

    bound = (dim * 3 * 3) ** -0.5  # PyTorch Conv2d default init range
    params = []
    for i in range(num_blocks):
        kw1, kb1, kw2, kb2 = keys[1 + 4 * i: 1 + 4 * (i + 1)]
        params.append(dict(
            w1=jax.random.uniform(kw1, (dim, dim, 3, 3), jnp.float32, -bound, bound),
            b1=jax.random.uniform(kb1, (dim,), jnp.float32, -bound, bound),
            w2=jax.random.uniform(kw2, (dim, dim, 3, 3), jnp.float32, -bound, bound),
            b2=jax.random.uniform(kb2, (dim,), jnp.float32, -bound, bound),
        ))

    out = res_blocks_forward(x, params, eps=eps)
    out = jax.block_until_ready(out)

    ref = _reference(x, params, eps=eps)
    assert out.shape == (batch, dim, H, W)
    assert jnp.allclose(out, ref, atol=2e-4, rtol=2e-4)
    print("KERNEL_OK")
</pallas_src>

<mosaic_0001>
module attributes {stable_mosaic.version = 11 : i64} {
  func.func @_inorm_kernel(%arg0: i32, %arg1: memref<8x256xf32, #tpu.memory_space<vmem>>, %arg2: memref<8x256xf32, #tpu.memory_space<vmem>>) attributes {dimension_semantics = [#tpu.dimension_semantics<parallel>], iteration_bounds = array<i64: 1>, scalar_prefetch = 0 : i64, scratch_operands = 0 : i64, tpu.core_type = #tpu.core_type<tc>, window_params = [{transform_indices = @transform_0, window_bounds = array<i64: 8, 256>}, {transform_indices = @transform_1, window_bounds = array<i64: 8, 256>}]} {
    %c0 = arith.constant 0 : index
    %c0_0 = arith.constant 0 : index
    %0 = vector.load %arg1[%c0, %c0_0] : memref<8x256xf32, #tpu.memory_space<vmem>>, vector<8x256xf32>
    %cst = arith.constant dense<0.000000e+00> : vector<8xf32>
    %1 = vector.multi_reduction <add>, %0, %cst [1] : vector<8x256xf32> to vector<8xf32>
    %2 = vector.shape_cast %1 : vector<8xf32> to vector<8x1xf32>
    %3 = arith.mulf %0, %0 : vector<8x256xf32>
    %cst_1 = arith.constant dense<0.000000e+00> : vector<8xf32>
    %4 = vector.multi_reduction <add>, %3, %cst_1 [1] : vector<8x256xf32> to vector<8xf32>
    %5 = vector.shape_cast %4 : vector<8xf32> to vector<8x1xf32>
    %cst_2 = arith.constant 3.906250e-03 : f32
    %6 = vector.broadcast %cst_2 : f32 to vector<8x1xf32>
    %7 = arith.mulf %2, %6 : vector<8x1xf32>
    %cst_3 = arith.constant 3.906250e-03 : f32
    %8 = vector.broadcast %cst_3 : f32 to vector<8x1xf32>
    %9 = arith.mulf %5, %8 : vector<8x1xf32>
    %10 = arith.mulf %7, %7 : vector<8x1xf32>
    %11 = arith.subf %9, %10 : vector<8x1xf32>
    %cst_4 = arith.constant 0.000000e+00 : f32
    %12 = vector.broadcast %cst_4 : f32 to vector<8x1xf32>
    %13 = arith.maximumf %11, %12 : vector<8x1xf32>
    %cst_5 = arith.constant 9.99999974E-6 : f32
    %14 = vector.broadcast %cst_5 : f32 to vector<8x1xf32>
    %15 = arith.addf %13, %14 : vector<8x1xf32>
    %16 = math.rsqrt %15 : vector<8x1xf32>
    %cst_6 = arith.constant 0.000000e+00 : f32
    %17 = vector.broadcast %cst_6 : f32 to vector<8x1xf32>
    %18 = arith.subf %17, %7 : vector<8x1xf32>
    %19 = arith.mulf %18, %16 : vector<8x1xf32>
    %20 = vector.broadcast %16 : vector<8x1xf32> to vector<8x256xf32>
    %21 = arith.mulf %0, %20 : vector<8x256xf32>
    %22 = vector.broadcast %19 : vector<8x1xf32> to vector<8x256xf32>
    %23 = arith.addf %21, %22 : vector<8x256xf32>
    %cst_7 = arith.constant 0.000000e+00 : f32
    %24 = vector.broadcast %cst_7 : f32 to vector<8x256xf32>
    %25 = arith.maximumf %23, %24 : vector<8x256xf32>
    %c0_8 = arith.constant 0 : index
    %c0_9 = arith.constant 0 : index
    %26 = vector.load %arg2[%c0_8, %c0_9] : memref<8x256xf32, #tpu.memory_space<vmem>>, vector<8x256xf32>
    tpu.vector_store %arg2[%c0_8, %c0_9], %25 {strides = array<i32>} : memref<8x256xf32, #tpu.memory_space<vmem>>, vector<8x256xf32>,
    return
  }
  func.func @transform_0(%arg0: i32) -> (i32, i32) {
    %c0_i32 = arith.constant 0 : i32
    %c0_i32_0 = arith.constant 0 : i32
    return %arg0, %c0_i32 : i32, i32
  }
  func.func @transform_1(%arg0: i32) -> (i32, i32) {
    %c0_i32 = arith.constant 0 : i32
    %c0_i32_0 = arith.constant 0 : i32
    return %arg0, %c0_i32 : i32, i32
  }
}

</mosaic_0001>

<llo_original>
// kernel: tpu_custom_call.1
$region0: #{tpu_custom_call.1}
  #allocation0 [shape = 'u32[]', space=smem, size = 0x4, offset = 0x4, fixed_abs, tag = 'smem constant byte address 0x4 - core index']
  #allocation1 [shape = 'u32[144,128]{1,0:T(1,128)}', space=vmem, size = 0x12000, scoped, tag = 'internal scratch']
  %s0 = inlined_call_operand.hbm [shape: f32[8,256], index: 0, kind: input, shape index: {}]
  %s1 = inlined_call_operand.hbm [shape: f32[8,256], index: 1, kind: output, shape index: {}]
  %s2 = sld [smem:[#allocation0]]
  $region18: #{tpu_custom_call.1} parent=0
    _
  %s4 = ssub.s32 1, %s2
  %s5 = scalar_select 0, %s4, %s2
  $region1: #{tpu_custom_call.1} parent=0
    #allocation2 [shape = 'u8[8192]{0}', space=vmem, size = 0x2000, scoped, tag = 'input window, operand 0, single buffered']
    #allocation3 [shape = 's32[1]{0}', space=sflag, size = 0x4, scoped, tag = 'scoped memory for tpu_custom_call.1']
    #allocation4 [shape = 's32[1]{0}', space=sflag, size = 0x4, scoped, tag = 'scoped memory for tpu_custom_call.1']
    #allocation5 [shape = 'u8[8192]{0}', space=vmem, size = 0x2000, scoped, tag = 'output window, operand 0, single buffered']
    %6 = vsyncpa [#allocation3], 0
    %7 = vsyncpa [#allocation4], 0
    // Predicated region
    $region2: #{tpu_custom_call.1} parent=1 // pred_check
      _
    $region3: #{tpu_custom_call.1} parent=1 // pred_check_branch
      %9 = sbr.rel (0) target = $region5
    $region4: #{tpu_custom_call.1} parent=1 // pred_region
      %s11 = ssub.s32 256, 256
      %12 = vsyncadd [#allocation3], %s11
      %s14 = sshll.u32 [#allocation2], 4
      %s15 = int_to_ptr.vmem [resolvable:$true] %s14
      %17 = dma.hbm_to_vmem [thread:$0]  %s0, 256, %s15, [#allocation3]
    $region5: #{tpu_custom_call.1} parent=1 // pred_fallthru
      _
    // Predicated region
    $region6: #{tpu_custom_call.1} parent=1 // pred_check
      _
    $region7: #{tpu_custom_call.1} parent=1 // pred_check_branch
      %19 = sbr.rel (0) target = $region9
    $region8: #{tpu_custom_call.1} parent=1 // pred_region
      %20 = dma.done [#allocation3], 256
    $region9: #{tpu_custom_call.1} parent=1 // pred_fallthru
      _
    %v21 = vld [vmem:[#allocation2] sm:$0xff]
    %v22 = vld [vmem:[#allocation2 + $0x8] sm:$0xff]
    %v23 = vadd.f32 %v21, %v22
    %24 = vadd.xlane.f32.xlu0 %v23
    %v25 = vpop.xlane.xlu0 %24
    %v26 = vmul.f32 %v21, %v21
    %v27 = vmul.f32 %v22, %v22
    %v28 = vadd.f32 %v26, %v27
    %29 = vadd.xlane.f32.xlu0 %v28
    %v30 = vpop.xlane.xlu0 %29
    %v31 = vmul.f32 %v25, 0.00390625
    %v32 = vmul.f32 %v30, 0.00390625
    %v33 = vmul.f32 %v31, %v31
    %v34 = vsub.f32 %v32, %v33
    %v35 = vmax.f32 %v34, 0.0
    %v36 = vadd.f32 %v35, 1e-05
    %v37 = vrsqrt.pop %v36
    %v38 = vsub.f32 0.0, %v31
    %v39 = vmul.f32 %v38, %v37
    %v40 = vmul.f32 %v21, %v37
    %v41 = vmul.f32 %v22, %v37
    %v42 = vadd.f32 %v40, %v39
    %v43 = vadd.f32 %v41, %v39
    %v44 = vmax.f32 %v42, 0.0
    %v45 = vmax.f32 %v43, 0.0
    %46 = vst [vmem:[#allocation5] sm:$0xff] %v44
    %47 = vst [vmem:[#allocation5 + $0x8] sm:$0xff] %v45
    // Predicated region
    $region10: #{tpu_custom_call.1} parent=1 // pred_check
      _
    $region11: #{tpu_custom_call.1} parent=1 // pred_check_branch
      %49 = sbr.rel (0) target = $region13
    $region12: #{tpu_custom_call.1} parent=1 // pred_region
      %s51 = ssub.s32 256, 256
      %52 = vsyncadd [#allocation4], %s51
      %s54 = sshll.u32 [#allocation5], 4
      %s55 = int_to_ptr.vmem [resolvable:$true] %s54
      %57 = dma.vmem_to_hbm [thread:$0]  %s55, 256, %s1, [#allocation4]
    $region13: #{tpu_custom_call.1} parent=1 // pred_fallthru
      _
    // Predicated region
    $region14: #{tpu_custom_call.1} parent=1 // pred_check
      _
    $region15: #{tpu_custom_call.1} parent=1 // pred_check_branch
      %59 = sbr.rel (0) target = $region17
    $region16: #{tpu_custom_call.1} parent=1 // pred_region
      %60 = dma.done [#allocation4], 256
    $region17: #{tpu_custom_call.1} parent=1 // pred_fallthru
      _
    %61 = vsyncpa [#allocation3], 1
    %62 = vsyncpa [#allocation4], 1

</llo_original>
